<compile_context>
chip_gen: v6e
topology: v6e:2x2x1
jax: 0.10.0
libtpu: 0.0.40
codegen_flags: <defaults>
</compile_context>

<pallas_src>
import functools

import jax
import jax.numpy as jnp
from jax.experimental import pallas as pl
from jax.experimental.pallas import tpu as pltpu


def mapper_kernel(x_ref, w_ref, b_ref, o_ref):
    # x_ref: (TM, D) f32 (streamed) | w_ref: (D, OUT) bf16 (resident)
    # b_ref: (1, OUT) f32 (resident) | o_ref: (TM, OUT) f32
    x_bf = x_ref[...].astype(jnp.bfloat16)          # in-kernel cast: VPU slack, one HBM read of x
    y = jnp.dot(x_bf, w_ref[...], preferred_element_type=jnp.float32)
    o_ref[...] = (y + b_ref[...]).astype(o_ref.dtype)   # fp32 epilogue (v5e-safe)


def prepare_mapper_params(w, b):
    """Cast/reshape the mapper params ONCE; cache the result outside jit."""
    w_bf = w.astype(jnp.bfloat16)                    # halves resident-weight HBM traffic
    b_row = b.reshape(1, -1).astype(jnp.float32)
    return w_bf, b_row


@functools.partial(jax.jit, static_argnames=("tm",))
def clip_mapper_forward(pooled, w_bf, b_row, *, tm=512):
    """pooled: [N, 1024] fp32 CLIP pooler_output; w_bf: [1024, OUT] bf16; b_row: [1, OUT] f32.

    Returns [N, OUT] fp32 (matches nn.Linear's fp32 output)."""
    n, d = pooled.shape
    out_dim = w_bf.shape[1]

    # Small pooler batches (B ~ 8-64) run as a single full-array grid step — no padding.
    # Larger N uses TM=512 row tiles; Pallas clips the ragged last block itself.
    block_rows = n if n <= tm else tm
    grid = (pl.cdiv(n, block_rows),)

    bytes_accessed = (n * d * 4            # streamed fp32 activations (read once)
                      + d * out_dim * 2    # resident bf16 weight
                      + out_dim * 4        # resident fp32 bias
                      + n * out_dim * 4)   # fp32 output writeback

    return pl.pallas_call(
        mapper_kernel,
        out_shape=jax.ShapeDtypeStruct((n, out_dim), jnp.float32),
        grid_spec=pltpu.PrefetchScalarGridSpec(
            num_scalar_prefetch=0,
            grid=grid,
            in_specs=[
                # Streamed activation row-tiles (double-buffered by Pallas).
                pl.BlockSpec((block_rows, d), lambda i: (i, 0)),
                # VMEM-resident weight / bias: same block every step -> single buffer.
                pl.BlockSpec((d, out_dim), lambda i: (0, 0),
                             pipeline_mode=pl.Buffered(1)),
                pl.BlockSpec((1, out_dim), lambda i: (0, 0),
                             pipeline_mode=pl.Buffered(1)),
            ],
            out_specs=pl.BlockSpec((block_rows, out_dim), lambda i: (i, 0)),
        ),
        compiler_params=pltpu.CompilerParams(
            dimension_semantics=("parallel",),  # shard row grid across TCs when grid > 1
        ),
        cost_estimate=pl.CostEstimate(
            flops=2 * n * d * out_dim,
            transcendentals=0,
            bytes_accessed=bytes_accessed,
        ),
    )(pooled, w_bf, b_row)


def init_params(key, d=1024, output_dim=256):
    kw, kb = jax.random.split(key)
    w = jax.random.normal(kw, (d, output_dim), jnp.float32) * (1.0 / jnp.sqrt(d))
    b = jax.random.normal(kb, (output_dim,), jnp.float32) * 0.01
    return w, b


def reference_forward(pooled, w_bf, b_row):
    """Pure-JAX reference, emulating bf16 MXU inputs with fp32 accumulation."""
    xb = pooled.astype(jnp.bfloat16).astype(jnp.float32)
    wb = w_bf.astype(jnp.float32)
    return xb @ wb + b_row


if __name__ == "__main__":
    d = 1024          # CLIP ViT-L/14 pooler_output width
    output_dim = 256  # module default
    batch = 8

    key = jax.random.PRNGKey(0)
    kx, kp = jax.random.split(key)
    # Stand-in for the frozen backbone's pooler_output features.
    pooled = jax.random.normal(kx, (batch, d), jnp.float32)
    w, b = init_params(kp, d, output_dim)

    # One-time param preparation (cached across calls; NOT re-done per forward).
    w_bf, b_row = prepare_mapper_params(w, b)

    out = jax.block_until_ready(clip_mapper_forward(pooled, w_bf, b_row))
    ref = reference_forward(pooled, w_bf, b_row)

    assert out.shape == (batch, output_dim)
    assert jnp.allclose(out, ref, atol=2e-3, rtol=2e-3), "mismatch vs reference"

    print("KERNEL_OK")
</pallas_src>

<mosaic_0001>
module attributes {stable_mosaic.version = 11 : i64} {
  func.func @mapper_kernel(%arg0: i32, %arg1: memref<8x1024xf32, #tpu.memory_space<vmem>>, %arg2: memref<1024x256xbf16, #tpu.memory_space<vmem>>, %arg3: memref<1x256xf32, #tpu.memory_space<vmem>>, %arg4: memref<8x256xf32, #tpu.memory_space<vmem>>) attributes {dimension_semantics = [#tpu.dimension_semantics<parallel>], iteration_bounds = array<i64: 1>, scalar_prefetch = 0 : i64, scratch_operands = 0 : i64, tpu.core_type = #tpu.core_type<tc>, window_params = [{transform_indices = @transform_0, window_bounds = array<i64: 8, 1024>}, {pipeline_mode = #tpu.pipeline_mode<synchronous>, transform_indices = @transform_1, window_bounds = array<i64: 1024, 256>}, {pipeline_mode = #tpu.pipeline_mode<synchronous>, transform_indices = @transform_2, window_bounds = array<i64: 1, 256>}, {transform_indices = @transform_3, window_bounds = array<i64: 8, 256>}]} {
    %c0 = arith.constant 0 : index
    %c0_0 = arith.constant 0 : index
    %0 = vector.load %arg1[%c0, %c0_0] : memref<8x1024xf32, #tpu.memory_space<vmem>>, vector<8x1024xf32>
    %1 = arith.truncf %0 : vector<8x1024xf32> to vector<8x1024xbf16>
    %c0_1 = arith.constant 0 : index
    %c0_2 = arith.constant 0 : index
    %2 = vector.load %arg2[%c0_1, %c0_2] : memref<1024x256xbf16, #tpu.memory_space<vmem>>, vector<1024x256xbf16>
    %cst = arith.constant dense<0.000000e+00> : vector<8x256xf32>
    %3 = tpu.matmul %1, %2, %cst {dimension_numbers = #tpu.dot_dimension_numbers<[1], [0], [0], [1], [0, 0, 1, 1], [], []>} : vector<8x1024xbf16>, vector<1024x256xbf16>, vector<8x256xf32> -> vector<8x256xf32>
    %c0_3 = arith.constant 0 : index
    %c0_4 = arith.constant 0 : index
    %4 = vector.load %arg3[%c0_3, %c0_4] : memref<1x256xf32, #tpu.memory_space<vmem>>, vector<1x256xf32>
    %5 = vector.broadcast %4 : vector<1x256xf32> to vector<8x256xf32>
    %6 = arith.addf %3, %5 : vector<8x256xf32>
    %c0_5 = arith.constant 0 : index
    %c0_6 = arith.constant 0 : index
    %7 = vector.load %arg4[%c0_5, %c0_6] : memref<8x256xf32, #tpu.memory_space<vmem>>, vector<8x256xf32>
    tpu.vector_store %arg4[%c0_5, %c0_6], %6 {strides = array<i32>} : memref<8x256xf32, #tpu.memory_space<vmem>>, vector<8x256xf32>,
    return
  }
  func.func @transform_0(%arg0: i32) -> (i32, i32) {
    %c0_i32 = arith.constant 0 : i32
    %c0_i32_0 = arith.constant 0 : i32
    return %arg0, %c0_i32 : i32, i32
  }
  func.func @transform_1(%arg0: i32) -> (i32, i32) {
    %c0_i32 = arith.constant 0 : i32
    %c0_i32_0 = arith.constant 0 : i32
    %c0_i32_1 = arith.constant 0 : i32
    return %c0_i32, %c0_i32_0 : i32, i32
  }
  func.func @transform_2(%arg0: i32) -> (i32, i32) {
    %c0_i32 = arith.constant 0 : i32
    %c0_i32_0 = arith.constant 0 : i32
    %c0_i32_1 = arith.constant 0 : i32
    return %c0_i32, %c0_i32_0 : i32, i32
  }
  func.func @transform_3(%arg0: i32) -> (i32, i32) {
    %c0_i32 = arith.constant 0 : i32
    %c0_i32_0 = arith.constant 0 : i32
    return %arg0, %c0_i32 : i32, i32
  }
}

</mosaic_0001>

<llo_original>
// kernel: clip_mapper_forward.1
$region0: #{clip_mapper_forward.1}
  #allocation0 [shape = 'u32[]', space=smem, size = 0x4, offset = 0x4, fixed_abs, tag = 'smem constant byte address 0x4 - core index']
  #allocation1 [shape = 'u32[144,128]{1,0:T(1,128)}', space=vmem, size = 0x12000, scoped, tag = 'internal scratch']
  %s0 = inlined_call_operand.hbm [shape: f32[8,1024], index: 0, kind: input, shape index: {}]
  %s1 = inlined_call_operand.hbm [shape: bf16[1024,256], index: 1, kind: input, shape index: {}]
  %s2 = inlined_call_operand.vmem [shape: f32[1,256], index: 2, kind: input, shape index: {}]
  %s3 = inlined_call_operand.hbm [shape: f32[8,256], index: 3, kind: output, shape index: {}]
  %s4 = sld [smem:[#allocation0]]
  $region30: #{clip_mapper_forward.1} parent=0
    _
  %s6 = ssub.s32 1, %s4
  %s7 = scalar_select 0, %s6, %s4
  $region1: #{clip_mapper_forward.1} parent=0
    #allocation2 [shape = 'u8[32768]{0}', space=vmem, size = 0x8000, scoped, tag = 'input window, operand 0, single buffered']
    #allocation3 [shape = 's32[1]{0}', space=sflag, size = 0x4, scoped, tag = 'scoped memory for clip_mapper_forward.1']
    #allocation4 [shape = 's32[1]{0}', space=sflag, size = 0x4, scoped, tag = 'scoped memory for clip_mapper_forward.1']
    #allocation5 [shape = 'u8[524288]{0}', space=vmem, size = 0x80000, scoped, tag = 'input window, operand 1, single buffered']
    #allocation6 [shape = 's32[1]{0}', space=sflag, size = 0x4, scoped, tag = 'scoped memory for clip_mapper_forward.1']
    #allocation7 [shape = 'u8[8192]{0}', space=vmem, size = 0x2000, scoped, tag = 'output window, operand 0, single buffered']
    %8 = vsyncpa [#allocation3], 0
    %9 = vsyncpa [#allocation6], 0
    %10 = vsyncpa [#allocation4], 0
    // Predicated region
    $region2: #{clip_mapper_forward.1} parent=1 // pred_check
      _
    $region3: #{clip_mapper_forward.1} parent=1 // pred_check_branch
      %12 = sbr.rel (0) target = $region5
    $region4: #{clip_mapper_forward.1} parent=1 // pred_region
      %s14 = ssub.s32 1024, 1024
      %15 = vsyncadd [#allocation3], %s14
      %s17 = sshll.u32 [#allocation2], 4
      %s18 = int_to_ptr.vmem [resolvable:$true] %s17
      %20 = dma.hbm_to_vmem [thread:$0]  %s0, 1024, %s18, [#allocation3]
    $region5: #{clip_mapper_forward.1} parent=1 // pred_fallthru
      _
    // Predicated region
    $region6: #{clip_mapper_forward.1} parent=1 // pred_check
      _
    $region7: #{clip_mapper_forward.1} parent=1 // pred_check_branch
      %22 = sbr.rel (0) target = $region9
    $region8: #{clip_mapper_forward.1} parent=1 // pred_region
      %s24 = ssub.s32 16384, 16384
      %25 = vsyncadd [#allocation6], %s24
      %s26 = sshll.u32 [#allocation5], 4
      %s27 = int_to_ptr.vmem [resolvable:$true] %s26
      %32 = dma.hbm_to_vmem [thread:$0]  %s1, 16384, %s27, [#allocation6], 128, 128, 8
    $region9: #{clip_mapper_forward.1} parent=1 // pred_fallthru
      _
    // Predicated region
    $region10: #{clip_mapper_forward.1} parent=1 // pred_check
      _
    $region11: #{clip_mapper_forward.1} parent=1 // pred_check_branch
      %34 = sbr.rel (0) target = $region13
    $region12: #{clip_mapper_forward.1} parent=1 // pred_region
      _
    $region13: #{clip_mapper_forward.1} parent=1 // pred_fallthru
      _
    // Predicated region
    $region14: #{clip_mapper_forward.1} parent=1 // pred_check
      _
    $region15: #{clip_mapper_forward.1} parent=1 // pred_check_branch
      %36 = sbr.rel (0) target = $region17
    $region16: #{clip_mapper_forward.1} parent=1 // pred_region
      %37 = dma.done [#allocation3], 1024
    $region17: #{clip_mapper_forward.1} parent=1 // pred_fallthru
      _
    // Predicated region
    $region18: #{clip_mapper_forward.1} parent=1 // pred_check
      _
    $region19: #{clip_mapper_forward.1} parent=1 // pred_check_branch
      %39 = sbr.rel (0) target = $region21
    $region20: #{clip_mapper_forward.1} parent=1 // pred_region
      %40 = dma.done [#allocation6], 16384
    $region21: #{clip_mapper_forward.1} parent=1 // pred_fallthru
      _
    %v41 = vld [vmem:[#allocation2] sm:$0xff]
    %v42 = vld [vmem:[#allocation2 + $0x8] sm:$0xff]
    %v43 = vld [vmem:[#allocation2 + $0x10] sm:$0xff]
    %v44 = vld [vmem:[#allocation2 + $0x18] sm:$0xff]
    %v45 = vld [vmem:[#allocation2 + $0x20] sm:$0xff]
    %v46 = vld [vmem:[#allocation2 + $0x28] sm:$0xff]
    %v47 = vld [vmem:[#allocation2 + $0x30] sm:$0xff]
    %v48 = vld [vmem:[#allocation2 + $0x38] sm:$0xff]
    %v49 = vpack.c.bf16 %v41, %v41
    %v50 = vpack.c.bf16 %v42, %v42
    %v51 = vpack.c.bf16 %v43, %v43
    %v52 = vpack.c.bf16 %v44, %v44
    %v53 = vpack.c.bf16 %v45, %v45
    %v54 = vpack.c.bf16 %v46, %v46
    %v55 = vpack.c.bf16 %v47, %v47
    %v56 = vpack.c.bf16 %v48, %v48
    %v57 = vld [vmem:[#allocation5] sm:$0xff]
    %v58 = vld [vmem:[#allocation5 + $0x8] sm:$0xff]
    %v59 = vld [vmem:[#allocation5 + $0x10] sm:$0xff]
    %v60 = vld [vmem:[#allocation5 + $0x18] sm:$0xff]
    %v61 = vld [vmem:[#allocation5 + $0x20] sm:$0xff]
    %v62 = vld [vmem:[#allocation5 + $0x28] sm:$0xff]
    %v63 = vld [vmem:[#allocation5 + $0x30] sm:$0xff]
    %v64 = vld [vmem:[#allocation5 + $0x38] sm:$0xff]
    %v65 = vld [vmem:[#allocation5 + $0x40] sm:$0xff]
    %v66 = vld [vmem:[#allocation5 + $0x48] sm:$0xff]
    %v67 = vld [vmem:[#allocation5 + $0x50] sm:$0xff]
    %v68 = vld [vmem:[#allocation5 + $0x58] sm:$0xff]
    %v69 = vld [vmem:[#allocation5 + $0x60] sm:$0xff]
    %v70 = vld [vmem:[#allocation5 + $0x68] sm:$0xff]
    %v71 = vld [vmem:[#allocation5 + $0x70] sm:$0xff]
    %v72 = vld [vmem:[#allocation5 + $0x78] sm:$0xff]
    %v73 = vld [vmem:[#allocation5 + $0x80] sm:$0xff]
    %v74 = vld [vmem:[#allocation5 + $0x88] sm:$0xff]
    %v75 = vld [vmem:[#allocation5 + $0x90] sm:$0xff]
    %v76 = vld [vmem:[#allocation5 + $0x98] sm:$0xff]
    %v77 = vld [vmem:[#allocation5 + $0xa0] sm:$0xff]
    %v78 = vld [vmem:[#allocation5 + $0xa8] sm:$0xff]
    %v79 = vld [vmem:[#allocation5 + $0xb0] sm:$0xff]
    %v80 = vld [vmem:[#allocation5 + $0xb8] sm:$0xff]
    %v81 = vld [vmem:[#allocation5 + $0xc0] sm:$0xff]
    %v82 = vld [vmem:[#allocation5 + $0xc8] sm:$0xff]
    %v83 = vld [vmem:[#allocation5 + $0xd0] sm:$0xff]
    %v84 = vld [vmem:[#allocation5 + $0xd8] sm:$0xff]
    %v85 = vld [vmem:[#allocation5 + $0xe0] sm:$0xff]
    %v86 = vld [vmem:[#allocation5 + $0xe8] sm:$0xff]
    %v87 = vld [vmem:[#allocation5 + $0xf0] sm:$0xff]
    %v88 = vld [vmem:[#allocation5 + $0xf8] sm:$0xff]
    %v89 = vld [vmem:[#allocation5 + $0x100] sm:$0xff]
    %v90 = vld [vmem:[#allocation5 + $0x108] sm:$0xff]
    %v91 = vld [vmem:[#allocation5 + $0x110] sm:$0xff]
    %v92 = vld [vmem:[#allocation5 + $0x118] sm:$0xff]
    %v93 = vld [vmem:[#allocation5 + $0x120] sm:$0xff]
    %v94 = vld [vmem:[#allocation5 + $0x128] sm:$0xff]
    %v95 = vld [vmem:[#allocation5 + $0x130] sm:$0xff]
    %v96 = vld [vmem:[#allocation5 + $0x138] sm:$0xff]
    %v97 = vld [vmem:[#allocation5 + $0x140] sm:$0xff]
    %v98 = vld [vmem:[#allocation5 + $0x148] sm:$0xff]
    %v99 = vld [vmem:[#allocation5 + $0x150] sm:$0xff]
    %v100 = vld [vmem:[#allocation5 + $0x158] sm:$0xff]
    %v101 = vld [vmem:[#allocation5 + $0x160] sm:$0xff]
    %v102 = vld [vmem:[#allocation5 + $0x168] sm:$0xff]
    %v103 = vld [vmem:[#allocation5 + $0x170] sm:$0xff]
    %v104 = vld [vmem:[#allocation5 + $0x178] sm:$0xff]
    %v105 = vld [vmem:[#allocation5 + $0x180] sm:$0xff]
    %v106 = vld [vmem:[#allocation5 + $0x188] sm:$0xff]
    %v107 = vld [vmem:[#allocation5 + $0x190] sm:$0xff]
    %v108 = vld [vmem:[#allocation5 + $0x198] sm:$0xff]
    %v109 = vld [vmem:[#allocation5 + $0x1a0] sm:$0xff]
    %v110 = vld [vmem:[#allocation5 + $0x1a8] sm:$0xff]
    %v111 = vld [vmem:[#allocation5 + $0x1b0] sm:$0xff]
    %v112 = vld [vmem:[#allocation5 + $0x1b8] sm:$0xff]
    %v113 = vld [vmem:[#allocation5 + $0x1c0] sm:$0xff]
    %v114 = vld [vmem:[#allocation5 + $0x1c8] sm:$0xff]
    %v115 = vld [vmem:[#allocation5 + $0x1d0] sm:$0xff]
    %v116 = vld [vmem:[#allocation5 + $0x1d8] sm:$0xff]
    %v117 = vld [vmem:[#allocation5 + $0x1e0] sm:$0xff]
    %v118 = vld [vmem:[#allocation5 + $0x1e8] sm:$0xff]
    %v119 = vld [vmem:[#allocation5 + $0x1f0] sm:$0xff]
    %v120 = vld [vmem:[#allocation5 + $0x1f8] sm:$0xff]
    %v121 = vld [vmem:[#allocation5 + $0x200] sm:$0xff]
    %v122 = vld [vmem:[#allocation5 + $0x208] sm:$0xff]
    %v123 = vld [vmem:[#allocation5 + $0x210] sm:$0xff]
    %v124 = vld [vmem:[#allocation5 + $0x218] sm:$0xff]
    %v125 = vld [vmem:[#allocation5 + $0x220] sm:$0xff]
    %v126 = vld [vmem:[#allocation5 + $0x228] sm:$0xff]
    %v127 = vld [vmem:[#allocation5 + $0x230] sm:$0xff]
    %v128 = vld [vmem:[#allocation5 + $0x238] sm:$0xff]
    %v129 = vld [vmem:[#allocation5 + $0x240] sm:$0xff]
    %v130 = vld [vmem:[#allocation5 + $0x248] sm:$0xff]
    %v131 = vld [vmem:[#allocation5 + $0x250] sm:$0xff]
    %v132 = vld [vmem:[#allocation5 + $0x258] sm:$0xff]
    %v133 = vld [vmem:[#allocation5 + $0x260] sm:$0xff]
    %v134 = vld [vmem:[#allocation5 + $0x268] sm:$0xff]
    %v135 = vld [vmem:[#allocation5 + $0x270] sm:$0xff]
    %v136 = vld [vmem:[#allocation5 + $0x278] sm:$0xff]
    %v137 = vld [vmem:[#allocation5 + $0x280] sm:$0xff]
    %v138 = vld [vmem:[#allocation5 + $0x288] sm:$0xff]
    %v139 = vld [vmem:[#allocation5 + $0x290] sm:$0xff]
    %v140 = vld [vmem:[#allocation5 + $0x298] sm:$0xff]
    %v141 = vld [vmem:[#allocation5 + $0x2a0] sm:$0xff]
    %v142 = vld [vmem:[#allocation5 + $0x2a8] sm:$0xff]
    %v143 = vld [vmem:[#allocation5 + $0x2b0] sm:$0xff]
    %v144 = vld [vmem:[#allocation5 + $0x2b8] sm:$0xff]
    %v145 = vld [vmem:[#allocation5 + $0x2c0] sm:$0xff]
    %v146 = vld [vmem:[#allocation5 + $0x2c8] sm:$0xff]
    %v147 = vld [vmem:[#allocation5 + $0x2d0] sm:$0xff]
    %v148 = vld [vmem:[#allocation5 + $0x2d8] sm:$0xff]
    %v149 = vld [vmem:[#allocation5 + $0x2e0] sm:$0xff]
    %v150 = vld [vmem:[#allocation5 + $0x2e8] sm:$0xff]
    %v151 = vld [vmem:[#allocation5 + $0x2f0] sm:$0xff]
    %v152 = vld [vmem:[#allocation5 + $0x2f8] sm:$0xff]
    %v153 = vld [vmem:[#allocation5 + $0x300] sm:$0xff]
    %v154 = vld [vmem:[#allocation5 + $0x308] sm:$0xff]
    %v155 = vld [vmem:[#allocation5 + $0x310] sm:$0xff]
    %v156 = vld [vmem:[#allocation5 + $0x318] sm:$0xff]
    %v157 = vld [vmem:[#allocation5 + $0x320] sm:$0xff]
    %v158 = vld [vmem:[#allocation5 + $0x328] sm:$0xff]
    %v159 = vld [vmem:[#allocation5 + $0x330] sm:$0xff]
    %v160 = vld [vmem:[#allocation5 + $0x338] sm:$0xff]
    %v161 = vld [vmem:[#allocation5 + $0x340] sm:$0xff]
    %v162 = vld [vmem:[#allocation5 + $0x348] sm:$0xff]
    %v163 = vld [vmem:[#allocation5 + $0x350] sm:$0xff]
    %v164 = vld [vmem:[#allocation5 + $0x358] sm:$0xff]
    %v165 = vld [vmem:[#allocation5 + $0x360] sm:$0xff]
    %v166 = vld [vmem:[#allocation5 + $0x368] sm:$0xff]
    %v167 = vld [vmem:[#allocation5 + $0x370] sm:$0xff]
    %v168 = vld [vmem:[#allocation5 + $0x378] sm:$0xff]
    %v169 = vld [vmem:[#allocation5 + $0x380] sm:$0xff]
    %v170 = vld [vmem:[#allocation5 + $0x388] sm:$0xff]
    %v171 = vld [vmem:[#allocation5 + $0x390] sm:$0xff]
    %v172 = vld [vmem:[#allocation5 + $0x398] sm:$0xff]
    %v173 = vld [vmem:[#allocation5 + $0x3a0] sm:$0xff]
    %v174 = vld [vmem:[#allocation5 + $0x3a8] sm:$0xff]
    %v175 = vld [vmem:[#allocation5 + $0x3b0] sm:$0xff]
    %v176 = vld [vmem:[#allocation5 + $0x3b8] sm:$0xff]
    %v177 = vld [vmem:[#allocation5 + $0x3c0] sm:$0xff]
    %v178 = vld [vmem:[#allocation5 + $0x3c8] sm:$0xff]
    %v179 = vld [vmem:[#allocation5 + $0x3d0] sm:$0xff]
    %v180 = vld [vmem:[#allocation5 + $0x3d8] sm:$0xff]
    %v181 = vld [vmem:[#allocation5 + $0x3e0] sm:$0xff]
    %v182 = vld [vmem:[#allocation5 + $0x3e8] sm:$0xff]
    %v183 = vld [vmem:[#allocation5 + $0x3f0] sm:$0xff]
    %v184 = vld [vmem:[#allocation5 + $0x3f8] sm:$0xff]
    %v185 = vld [vmem:[%s2] sm:$0x3]
    %v187 = vlaneseq
    %v188 = vshrl.u32 %v187, 7
    %v189 = vsub.s32 0, %v188
    %v190 = vrot.slane %v185, %v189
    %v191 = vlaneseq
    %v192 = vshrl.u32 %v191, 7
    %v193 = vsub.s32 1, %v192
    %v194 = vrot.slane %v185, %v193
    %v325 = vunpack.c.l.b16 %v57
    %v326 = vunpack.c.h.b16 %v57
    %v327 = vunpack.c.l.b16 %v58
    %v328 = vunpack.c.h.b16 %v58
    %v329 = vunpack.c.l.b16 %v59
    %v330 = vunpack.c.h.b16 %v59
    %v331 = vunpack.c.l.b16 %v60
    %v332 = vunpack.c.h.b16 %v60
    %v333 = vunpack.c.l.b16 %v61
    %v334 = vunpack.c.h.b16 %v61
    %v335 = vunpack.c.l.b16 %v62
    %v336 = vunpack.c.h.b16 %v62
    %v337 = vunpack.c.l.b16 %v63
    %v338 = vunpack.c.h.b16 %v63
    %v339 = vunpack.c.l.b16 %v64
    %v340 = vunpack.c.h.b16 %v64
    %v341 = vunpack.c.l.b16 %v65
    %v342 = vunpack.c.h.b16 %v65
    %v343 = vunpack.c.l.b16 %v66
    %v344 = vunpack.c.h.b16 %v66
    %v345 = vunpack.c.l.b16 %v67
    %v346 = vunpack.c.h.b16 %v67
    %v347 = vunpack.c.l.b16 %v68
    %v348 = vunpack.c.h.b16 %v68
    %v349 = vunpack.c.l.b16 %v69
    %v350 = vunpack.c.h.b16 %v69
    %v351 = vunpack.c.l.b16 %v70
    %v352 = vunpack.c.h.b16 %v70
    %v353 = vunpack.c.l.b16 %v71
    %v354 = vunpack.c.h.b16 %v71
    %v355 = vunpack.c.l.b16 %v72
    %v356 = vunpack.c.h.b16 %v72
    %v357 = vunpack.c.l.b16 %v73
    %v358 = vunpack.c.h.b16 %v73
    %v359 = vunpack.c.l.b16 %v74
    %v360 = vunpack.c.h.b16 %v74
    %v361 = vunpack.c.l.b16 %v75
    %v362 = vunpack.c.h.b16 %v75
    %v363 = vunpack.c.l.b16 %v76
    %v364 = vunpack.c.h.b16 %v76
    %v365 = vunpack.c.l.b16 %v77
    %v366 = vunpack.c.h.b16 %v77
    %v367 = vunpack.c.l.b16 %v78
    %v368 = vunpack.c.h.b16 %v78
    %v369 = vunpack.c.l.b16 %v79
    %v370 = vunpack.c.h.b16 %v79
    %v371 = vunpack.c.l.b16 %v80
    %v372 = vunpack.c.h.b16 %v80
    %v373 = vunpack.c.l.b16 %v81
    %v374 = vunpack.c.h.b16 %v81
    %v375 = vunpack.c.l.b16 %v82
    %v376 = vunpack.c.h.b16 %v82
    %v377 = vunpack.c.l.b16 %v83
    %v378 = vunpack.c.h.b16 %v83
    %v379 = vunpack.c.l.b16 %v84
    %v380 = vunpack.c.h.b16 %v84
    %v381 = vunpack.c.l.b16 %v85
    %v382 = vunpack.c.h.b16 %v85
    %v383 = vunpack.c.l.b16 %v86
    %v384 = vunpack.c.h.b16 %v86
    %v385 = vunpack.c.l.b16 %v87
    %v386 = vunpack.c.h.b16 %v87
    %v387 = vunpack.c.l.b16 %v88
    %v388 = vunpack.c.h.b16 %v88
    %v389 = vunpack.c.l.b16 %v89
    %v390 = vunpack.c.h.b16 %v89
    %v391 = vunpack.c.l.b16 %v90
    %v392 = vunpack.c.h.b16 %v90
    %v393 = vunpack.c.l.b16 %v91
    %v394 = vunpack.c.h.b16 %v91
    %v395 = vunpack.c.l.b16 %v92
    %v396 = vunpack.c.h.b16 %v92
    %v397 = vunpack.c.l.b16 %v93
    %v398 = vunpack.c.h.b16 %v93
    %v399 = vunpack.c.l.b16 %v94
    %v400 = vunpack.c.h.b16 %v94
    %v401 = vunpack.c.l.b16 %v95
    %v402 = vunpack.c.h.b16 %v95
    %v403 = vunpack.c.l.b16 %v96
    %v404 = vunpack.c.h.b16 %v96
    %v405 = vunpack.c.l.b16 %v97
    %v406 = vunpack.c.h.b16 %v97
    %v407 = vunpack.c.l.b16 %v98
    %v408 = vunpack.c.h.b16 %v98
    %v409 = vunpack.c.l.b16 %v99
    %v410 = vunpack.c.h.b16 %v99
    %v411 = vunpack.c.l.b16 %v100
    %v412 = vunpack.c.h.b16 %v100
    %v413 = vunpack.c.l.b16 %v101
    %v414 = vunpack.c.h.b16 %v101
    %v415 = vunpack.c.l.b16 %v102
    %v416 = vunpack.c.h.b16 %v102
    %v417 = vunpack.c.l.b16 %v103
    %v418 = vunpack.c.h.b16 %v103
    %v419 = vunpack.c.l.b16 %v104
    %v420 = vunpack.c.h.b16 %v104
    %v421 = vunpack.c.l.b16 %v105
    %v422 = vunpack.c.h.b16 %v105
    %v423 = vunpack.c.l.b16 %v106
    %v424 = vunpack.c.h.b16 %v106
    %v425 = vunpack.c.l.b16 %v107
    %v426 = vunpack.c.h.b16 %v107
    %v427 = vunpack.c.l.b16 %v108
    %v428 = vunpack.c.h.b16 %v108
    %v429 = vunpack.c.l.b16 %v109
    %v430 = vunpack.c.h.b16 %v109
    %v431 = vunpack.c.l.b16 %v110
    %v432 = vunpack.c.h.b16 %v110
    %v433 = vunpack.c.l.b16 %v111
    %v434 = vunpack.c.h.b16 %v111
    %v435 = vunpack.c.l.b16 %v112
    %v436 = vunpack.c.h.b16 %v112
    %v437 = vunpack.c.l.b16 %v113
    %v438 = vunpack.c.h.b16 %v113
    %v439 = vunpack.c.l.b16 %v114
    %v440 = vunpack.c.h.b16 %v114
    %v441 = vunpack.c.l.b16 %v115
    %v442 = vunpack.c.h.b16 %v115
    %v443 = vunpack.c.l.b16 %v116
    %v444 = vunpack.c.h.b16 %v116
    %v445 = vunpack.c.l.b16 %v117
    %v446 = vunpack.c.h.b16 %v117
    %v447 = vunpack.c.l.b16 %v118
    %v448 = vunpack.c.h.b16 %v118
    %v449 = vunpack.c.l.b16 %v119
    %v450 = vunpack.c.h.b16 %v119
    %v451 = vunpack.c.l.b16 %v120
    %v452 = vunpack.c.h.b16 %v120
    %v453 = vunpack.c.l.b16 %v121
    %v454 = vunpack.c.h.b16 %v121
    %v455 = vunpack.c.l.b16 %v122
    %v456 = vunpack.c.h.b16 %v122
    %v457 = vunpack.c.l.b16 %v123
    %v458 = vunpack.c.h.b16 %v123
    %v459 = vunpack.c.l.b16 %v124
    %v460 = vunpack.c.h.b16 %v124
    %v461 = vunpack.c.l.b16 %v125
    %v462 = vunpack.c.h.b16 %v125
    %v463 = vunpack.c.l.b16 %v126
    %v464 = vunpack.c.h.b16 %v126
    %v465 = vunpack.c.l.b16 %v127
    %v466 = vunpack.c.h.b16 %v127
    %v467 = vunpack.c.l.b16 %v128
    %v468 = vunpack.c.h.b16 %v128
    %v469 = vunpack.c.l.b16 %v129
    %v470 = vunpack.c.h.b16 %v129
    %v471 = vunpack.c.l.b16 %v130
    %v472 = vunpack.c.h.b16 %v130
    %v473 = vunpack.c.l.b16 %v131
    %v474 = vunpack.c.h.b16 %v131
    %v475 = vunpack.c.l.b16 %v132
    %v476 = vunpack.c.h.b16 %v132
    %v477 = vunpack.c.l.b16 %v133
    %v478 = vunpack.c.h.b16 %v133
    %v479 = vunpack.c.l.b16 %v134
    %v480 = vunpack.c.h.b16 %v134
    %v481 = vunpack.c.l.b16 %v135
    %v482 = vunpack.c.h.b16 %v135
    %v483 = vunpack.c.l.b16 %v136
    %v484 = vunpack.c.h.b16 %v136
    %v485 = vunpack.c.l.b16 %v137
    %v486 = vunpack.c.h.b16 %v137
    %v487 = vunpack.c.l.b16 %v138
    %v488 = vunpack.c.h.b16 %v138
    %v489 = vunpack.c.l.b16 %v139
    %v490 = vunpack.c.h.b16 %v139
    %v491 = vunpack.c.l.b16 %v140
    %v492 = vunpack.c.h.b16 %v140
    %v493 = vunpack.c.l.b16 %v141
    %v494 = vunpack.c.h.b16 %v141
    %v495 = vunpack.c.l.b16 %v142
    %v496 = vunpack.c.h.b16 %v142
    %v497 = vunpack.c.l.b16 %v143
    %v498 = vunpack.c.h.b16 %v143
    %v499 = vunpack.c.l.b16 %v144
    %v500 = vunpack.c.h.b16 %v144
    %v501 = vunpack.c.l.b16 %v145
    %v502 = vunpack.c.h.b16 %v145
    %v503 = vunpack.c.l.b16 %v146
    %v504 = vunpack.c.h.b16 %v146
    %v505 = vunpack.c.l.b16 %v147
    %v506 = vunpack.c.h.b16 %v147
    %v507 = vunpack.c.l.b16 %v148
    %v508 = vunpack.c.h.b16 %v148
    %v509 = vunpack.c.l.b16 %v149
    %v510 = vunpack.c.h.b16 %v149
    %v511 = vunpack.c.l.b16 %v150
    %v512 = vunpack.c.h.b16 %v150
    %v513 = vunpack.c.l.b16 %v151
    %v514 = vunpack.c.h.b16 %v151
    %v515 = vunpack.c.l.b16 %v152
    %v516 = vunpack.c.h.b16 %v152
    %v517 = vunpack.c.l.b16 %v153
    %v518 = vunpack.c.h.b16 %v153
    %v519 = vunpack.c.l.b16 %v154
    %v520 = vunpack.c.h.b16 %v154
    %v521 = vunpack.c.l.b16 %v155
    %v522 = vunpack.c.h.b16 %v155
    %v523 = vunpack.c.l.b16 %v156
    %v524 = vunpack.c.h.b16 %v156
    %v525 = vunpack.c.l.b16 %v157
    %v526 = vunpack.c.h.b16 %v157
    %v527 = vunpack.c.l.b16 %v158
    %v528 = vunpack.c.h.b16 %v158
    %v529 = vunpack.c.l.b16 %v159
    %v530 = vunpack.c.h.b16 %v159
    %v531 = vunpack.c.l.b16 %v160
    %v532 = vunpack.c.h.b16 %v160
    %v533 = vunpack.c.l.b16 %v161
    %v534 = vunpack.c.h.b16 %v161
    %v535 = vunpack.c.l.b16 %v162
    %v536 = vunpack.c.h.b16 %v162
    %v537 = vunpack.c.l.b16 %v163
    %v538 = vunpack.c.h.b16 %v163
    %v539 = vunpack.c.l.b16 %v164
    %v540 = vunpack.c.h.b16 %v164
    %v541 = vunpack.c.l.b16 %v165
    %v542 = vunpack.c.h.b16 %v165
    %v543 = vunpack.c.l.b16 %v166
    %v544 = vunpack.c.h.b16 %v166
    %v545 = vunpack.c.l.b16 %v167
    %v546 = vunpack.c.h.b16 %v167
    %v547 = vunpack.c.l.b16 %v168
    %v548 = vunpack.c.h.b16 %v168
    %v549 = vunpack.c.l.b16 %v169
    %v550 = vunpack.c.h.b16 %v169
    %v551 = vunpack.c.l.b16 %v170
    %v552 = vunpack.c.h.b16 %v170
    %v553 = vunpack.c.l.b16 %v171
    %v554 = vunpack.c.h.b16 %v171
    %v555 = vunpack.c.l.b16 %v172
    %v556 = vunpack.c.h.b16 %v172
    %v557 = vunpack.c.l.b16 %v173
    %v558 = vunpack.c.h.b16 %v173
    %v559 = vunpack.c.l.b16 %v174
    %v560 = vunpack.c.h.b16 %v174
    %v561 = vunpack.c.l.b16 %v175
    %v562 = vunpack.c.h.b16 %v175
    %v563 = vunpack.c.l.b16 %v176
    %v564 = vunpack.c.h.b16 %v176
    %v565 = vunpack.c.l.b16 %v177
    %v566 = vunpack.c.h.b16 %v177
    %v567 = vunpack.c.l.b16 %v178
    %v568 = vunpack.c.h.b16 %v178
    %v569 = vunpack.c.l.b16 %v179
    %v570 = vunpack.c.h.b16 %v179
    %v571 = vunpack.c.l.b16 %v180
    %v572 = vunpack.c.h.b16 %v180
    %v573 = vunpack.c.l.b16 %v181
    %v574 = vunpack.c.h.b16 %v181
    %v575 = vunpack.c.l.b16 %v182
    %v576 = vunpack.c.h.b16 %v182
    %v577 = vunpack.c.l.b16 %v183
    %v578 = vunpack.c.h.b16 %v183
    %v579 = vunpack.c.l.b16 %v184
    %v580 = vunpack.c.h.b16 %v184
    %v581 = vpack.c.b16 %v327, %v325
    %v582 = vpack.c.b16 %v328, %v326
    %v583 = vpack.c.b16 %v331, %v329
    %v584 = vpack.c.b16 %v332, %v330
    %v585 = vpack.c.b16 %v335, %v333
    %v586 = vpack.c.b16 %v336, %v334
    %v587 = vpack.c.b16 %v339, %v337
    %v588 = vpack.c.b16 %v340, %v338
    %v589 = vpack.c.b16 %v343, %v341
    %v590 = vpack.c.b16 %v344, %v342
    %v591 = vpack.c.b16 %v347, %v345
    %v592 = vpack.c.b16 %v348, %v346
    %v593 = vpack.c.b16 %v351, %v349
    %v594 = vpack.c.b16 %v352, %v350
    %v595 = vpack.c.b16 %v355, %v353
    %v596 = vpack.c.b16 %v356, %v354
    %v597 = vpack.c.b16 %v359, %v357
    %v598 = vpack.c.b16 %v360, %v358
    %v599 = vpack.c.b16 %v363, %v361
    %v600 = vpack.c.b16 %v364, %v362
    %v601 = vpack.c.b16 %v367, %v365
    %v602 = vpack.c.b16 %v368, %v366
    %v603 = vpack.c.b16 %v371, %v369
    %v604 = vpack.c.b16 %v372, %v370
    %v605 = vpack.c.b16 %v375, %v373
    %v606 = vpack.c.b16 %v376, %v374
    %v607 = vpack.c.b16 %v379, %v377
    %v608 = vpack.c.b16 %v380, %v378
    %v609 = vpack.c.b16 %v383, %v381
    %v610 = vpack.c.b16 %v384, %v382
    %v611 = vpack.c.b16 %v387, %v385
    %v612 = vpack.c.b16 %v388, %v386
    %v613 = vpack.c.b16 %v391, %v389
    %v614 = vpack.c.b16 %v392, %v390
    %v615 = vpack.c.b16 %v395, %v393
    %v616 = vpack.c.b16 %v396, %v394
    %v617 = vpack.c.b16 %v399, %v397
    %v618 = vpack.c.b16 %v400, %v398
    %v619 = vpack.c.b16 %v403, %v401
    %v620 = vpack.c.b16 %v404, %v402
    %v621 = vpack.c.b16 %v407, %v405
    %v622 = vpack.c.b16 %v408, %v406
    %v623 = vpack.c.b16 %v411, %v409
    %v624 = vpack.c.b16 %v412, %v410
    %v625 = vpack.c.b16 %v415, %v413
    %v626 = vpack.c.b16 %v416, %v414
    %v627 = vpack.c.b16 %v419, %v417
    %v628 = vpack.c.b16 %v420, %v418
    %v629 = vpack.c.b16 %v423, %v421
    %v630 = vpack.c.b16 %v424, %v422
    %v631 = vpack.c.b16 %v427, %v425
    %v632 = vpack.c.b16 %v428, %v426
    %v633 = vpack.c.b16 %v431, %v429
    %v634 = vpack.c.b16 %v432, %v430
    %v635 = vpack.c.b16 %v435, %v433
    %v636 = vpack.c.b16 %v436, %v434
    %v637 = vpack.c.b16 %v439, %v437
    %v638 = vpack.c.b16 %v440, %v438
    %v639 = vpack.c.b16 %v443, %v441
    %v640 = vpack.c.b16 %v444, %v442
    %v641 = vpack.c.b16 %v447, %v445
    %v642 = vpack.c.b16 %v448, %v446
    %v643 = vpack.c.b16 %v451, %v449
    %v644 = vpack.c.b16 %v452, %v450
    %v645 = vpack.c.b16 %v455, %v453
    %v646 = vpack.c.b16 %v456, %v454
    %v647 = vpack.c.b16 %v459, %v457
    %v648 = vpack.c.b16 %v460, %v458
    %v649 = vpack.c.b16 %v463, %v461
    %v650 = vpack.c.b16 %v464, %v462
    %v651 = vpack.c.b16 %v467, %v465
    %v652 = vpack.c.b16 %v468, %v466
    %v653 = vpack.c.b16 %v471, %v469
    %v654 = vpack.c.b16 %v472, %v470
    %v655 = vpack.c.b16 %v475, %v473
    %v656 = vpack.c.b16 %v476, %v474
    %v657 = vpack.c.b16 %v479, %v477
    %v658 = vpack.c.b16 %v480, %v478
    %v659 = vpack.c.b16 %v483, %v481
    %v660 = vpack.c.b16 %v484, %v482
    %v661 = vpack.c.b16 %v487, %v485
    %v662 = vpack.c.b16 %v488, %v486
    %v663 = vpack.c.b16 %v491, %v489
    %v664 = vpack.c.b16 %v492, %v490
    %v665 = vpack.c.b16 %v495, %v493
    %v666 = vpack.c.b16 %v496, %v494
    %v667 = vpack.c.b16 %v499, %v497
    %v668 = vpack.c.b16 %v500, %v498
    %v669 = vpack.c.b16 %v503, %v501
    %v670 = vpack.c.b16 %v504, %v502
    %v671 = vpack.c.b16 %v507, %v505
    %v672 = vpack.c.b16 %v508, %v506
    %v673 = vpack.c.b16 %v511, %v509
    %v674 = vpack.c.b16 %v512, %v510
    %v675 = vpack.c.b16 %v515, %v513
    %v676 = vpack.c.b16 %v516, %v514
    %v677 = vpack.c.b16 %v519, %v517
    %v678 = vpack.c.b16 %v520, %v518
    %v679 = vpack.c.b16 %v523, %v521
    %v680 = vpack.c.b16 %v524, %v522
    %v681 = vpack.c.b16 %v527, %v525
    %v682 = vpack.c.b16 %v528, %v526
    %v683 = vpack.c.b16 %v531, %v529
    %v684 = vpack.c.b16 %v532, %v530
    %v685 = vpack.c.b16 %v535, %v533
    %v686 = vpack.c.b16 %v536, %v534
    %v687 = vpack.c.b16 %v539, %v537
    %v688 = vpack.c.b16 %v540, %v538
    %v689 = vpack.c.b16 %v543, %v541
    %v690 = vpack.c.b16 %v544, %v542
    %v691 = vpack.c.b16 %v547, %v545
    %v692 = vpack.c.b16 %v548, %v546
    %v693 = vpack.c.b16 %v551, %v549
    %v694 = vpack.c.b16 %v552, %v550
    %v695 = vpack.c.b16 %v555, %v553
    %v696 = vpack.c.b16 %v556, %v554
    %v697 = vpack.c.b16 %v559, %v557
    %v698 = vpack.c.b16 %v560, %v558
    %v699 = vpack.c.b16 %v563, %v561
    %v700 = vpack.c.b16 %v564, %v562
    %v701 = vpack.c.b16 %v567, %v565
    %v702 = vpack.c.b16 %v568, %v566
    %v703 = vpack.c.b16 %v571, %v569
    %v704 = vpack.c.b16 %v572, %v570
    %v705 = vpack.c.b16 %v575, %v573
    %v706 = vpack.c.b16 %v576, %v574
    %v707 = vpack.c.b16 %v579, %v577
    %v708 = vpack.c.b16 %v580, %v578
    %837 = vmatprep.subr.bf16.mxu0 %v596
    %838 = vmatpush1.bf16.msra.mxu0 %v595
    %839 = vmatprep.subr.bf16.mxu0 %v594
    %840 = vmatpush1.bf16.msra.mxu0 %v593
    %841 = vmatprep.subr.bf16.mxu0 %v592
    %842 = vmatpush1.bf16.msra.mxu0 %v591
    %843 = vmatprep.subr.bf16.mxu0 %v590
    %844 = vmatpush1.bf16.msra.mxu0 %v589
    %845 = vmatprep.subr.bf16.mxu0 %v588
    %846 = vmatpush1.bf16.msra.mxu0 %v587
    %847 = vmatprep.subr.bf16.mxu0 %v586
    %848 = vmatpush1.bf16.msra.mxu0 %v585
    %849 = vmatprep.subr.bf16.mxu0 %v584
    %850 = vmatpush1.bf16.msra.mxu0 %v583
    %851 = vmatprep.subr.bf16.mxu0 %v582
    %852 = vmatpush1.bf16.msra.mxu0 %v581
    %853 = vmatprep.subr.bf16.mxu0 %v612
    %854 = vmatpush2.bf16.msra.mxu0 %v611
    %855 = vmatprep.subr.bf16.mxu0 %v610
    %856 = vmatpush2.bf16.msra.mxu0 %v609
    %857 = vmatprep.subr.bf16.mxu0 %v608
    %858 = vmatpush2.bf16.msra.mxu0 %v607
    %859 = vmatprep.subr.bf16.mxu0 %v606
    %860 = vmatpush2.bf16.msra.mxu0 %v605
    %861 = vmatprep.subr.bf16.mxu0 %v604
    %862 = vmatpush2.bf16.msra.mxu0 %v603
    %863 = vmatprep.subr.bf16.mxu0 %v602
    %864 = vmatpush2.bf16.msra.mxu0 %v601
    %865 = vmatprep.subr.bf16.mxu0 %v600
    %866 = vmatpush2.bf16.msra.mxu0 %v599
    %867 = vmatprep.subr.bf16.mxu0 %v598
    %868 = vmatpush2.bf16.msra.mxu0 %v597
    %869 = vmatprep.mubr.bf16.mxu0 %v50
    %870 = vmatmul.mubr.bf16.gmra.mxu0 %v49
    %v871 = vpop.f32.mrf.mxu0
    %v872 = vadd.f32 %v190, %v871
    %v873 = vpop.f32.mrf.mxu0
    %v874 = vadd.f32 %v194, %v873
    %v875 = vpop.f32.mrf.mxu0
    %v876 = vpop.f32.mrf.mxu0
    %877 = vdwg.mxu0
    %878 = vmatprep.subr.bf16.mxu0 %v628
    %879 = vmatpush1.bf16.msra.mxu0 %v627
    %880 = vmatprep.subr.bf16.mxu0 %v626
    %881 = vmatpush1.bf16.msra.mxu0 %v625
    %882 = vmatprep.subr.bf16.mxu0 %v624
    %883 = vmatpush1.bf16.msra.mxu0 %v623
    %884 = vmatprep.subr.bf16.mxu0 %v622
    %885 = vmatpush1.bf16.msra.mxu0 %v621
    %886 = vmatprep.subr.bf16.mxu0 %v620
    %887 = vmatpush1.bf16.msra.mxu0 %v619
    %888 = vmatprep.subr.bf16.mxu0 %v618
    %889 = vmatpush1.bf16.msra.mxu0 %v617
    %890 = vmatprep.subr.bf16.mxu0 %v616
    %891 = vmatpush1.bf16.msra.mxu0 %v615
    %892 = vmatprep.subr.bf16.mxu0 %v614
    %893 = vmatpush1.bf16.msra.mxu0 %v613
    %894 = vmatprep.subr.bf16.mxu0 %v644
    %895 = vmatpush2.bf16.msra.mxu0 %v643
    %896 = vmatprep.subr.bf16.mxu0 %v642
    %897 = vmatpush2.bf16.msra.mxu0 %v641
    %898 = vmatprep.subr.bf16.mxu0 %v640
    %899 = vmatpush2.bf16.msra.mxu0 %v639
    %900 = vmatprep.subr.bf16.mxu0 %v638
    %901 = vmatpush2.bf16.msra.mxu0 %v637
    %902 = vmatprep.subr.bf16.mxu0 %v636
    %903 = vmatpush2.bf16.msra.mxu0 %v635
    %904 = vmatprep.subr.bf16.mxu0 %v634
    %905 = vmatpush2.bf16.msra.mxu0 %v633
    %906 = vmatprep.subr.bf16.mxu0 %v632
    %907 = vmatpush2.bf16.msra.mxu0 %v631
    %908 = vmatprep.subr.bf16.mxu0 %v630
    %909 = vmatpush2.bf16.msra.mxu0 %v629
    %910 = vmatprep.mubr.bf16.mxu0 %v52
    %911 = vmatmul.mubr.bf16.gmra.mxu0 %v51
    %v912 = vpop.f32.mrf.mxu0
    %v913 = vadd.f32 %v872, %v912
    %v914 = vpop.f32.mrf.mxu0
    %v915 = vadd.f32 %v874, %v914
    %v916 = vpop.f32.mrf.mxu0
    %v917 = vpop.f32.mrf.mxu0
    %918 = vdwg.mxu0
    %919 = vmatprep.subr.bf16.mxu0 %v660
    %920 = vmatpush1.bf16.msra.mxu0 %v659
    %921 = vmatprep.subr.bf16.mxu0 %v658
    %922 = vmatpush1.bf16.msra.mxu0 %v657
    %923 = vmatprep.subr.bf16.mxu0 %v656
    %924 = vmatpush1.bf16.msra.mxu0 %v655
    %925 = vmatprep.subr.bf16.mxu0 %v654
    %926 = vmatpush1.bf16.msra.mxu0 %v653
    %927 = vmatprep.subr.bf16.mxu0 %v652
    %928 = vmatpush1.bf16.msra.mxu0 %v651
    %929 = vmatprep.subr.bf16.mxu0 %v650
    %930 = vmatpush1.bf16.msra.mxu0 %v649
    %931 = vmatprep.subr.bf16.mxu0 %v648
    %932 = vmatpush1.bf16.msra.mxu0 %v647
    %933 = vmatprep.subr.bf16.mxu0 %v646
    %934 = vmatpush1.bf16.msra.mxu0 %v645
    %935 = vmatprep.subr.bf16.mxu0 %v676
    %936 = vmatpush2.bf16.msra.mxu0 %v675
    %937 = vmatprep.subr.bf16.mxu0 %v674
    %938 = vmatpush2.bf16.msra.mxu0 %v673
    %939 = vmatprep.subr.bf16.mxu0 %v672
    %940 = vmatpush2.bf16.msra.mxu0 %v671
    %941 = vmatprep.subr.bf16.mxu0 %v670
    %942 = vmatpush2.bf16.msra.mxu0 %v669
    %943 = vmatprep.subr.bf16.mxu0 %v668
    %944 = vmatpush2.bf16.msra.mxu0 %v667
    %945 = vmatprep.subr.bf16.mxu0 %v666
    %946 = vmatpush2.bf16.msra.mxu0 %v665
    %947 = vmatprep.subr.bf16.mxu0 %v664
    %948 = vmatpush2.bf16.msra.mxu0 %v663
    %949 = vmatprep.subr.bf16.mxu0 %v662
    %950 = vmatpush2.bf16.msra.mxu0 %v661
    %951 = vmatprep.mubr.bf16.mxu0 %v54
    %952 = vmatmul.mubr.bf16.gmra.mxu0 %v53
    %v953 = vpop.f32.mrf.mxu0
    %v954 = vadd.f32 %v913, %v953
    %v955 = vpop.f32.mrf.mxu0
    %v956 = vadd.f32 %v915, %v955
    %v957 = vpop.f32.mrf.mxu0
    %v958 = vpop.f32.mrf.mxu0
    %959 = vdwg.mxu0
    %960 = vmatprep.subr.bf16.mxu0 %v692
    %961 = vmatpush1.bf16.msra.mxu0 %v691
    %962 = vmatprep.subr.bf16.mxu0 %v690
    %963 = vmatpush1.bf16.msra.mxu0 %v689
    %964 = vmatprep.subr.bf16.mxu0 %v688
    %965 = vmatpush1.bf16.msra.mxu0 %v687
    %966 = vmatprep.subr.bf16.mxu0 %v686
    %967 = vmatpush1.bf16.msra.mxu0 %v685
    %968 = vmatprep.subr.bf16.mxu0 %v684
    %969 = vmatpush1.bf16.msra.mxu0 %v683
    %970 = vmatprep.subr.bf16.mxu0 %v682
    %971 = vmatpush1.bf16.msra.mxu0 %v681
    %972 = vmatprep.subr.bf16.mxu0 %v680
    %973 = vmatpush1.bf16.msra.mxu0 %v679
    %974 = vmatprep.subr.bf16.mxu0 %v678
    %975 = vmatpush1.bf16.msra.mxu0 %v677
    %976 = vmatprep.subr.bf16.mxu0 %v708
    %977 = vmatpush2.bf16.msra.mxu0 %v707
    %978 = vmatprep.subr.bf16.mxu0 %v706
    %979 = vmatpush2.bf16.msra.mxu0 %v705
    %980 = vmatprep.subr.bf16.mxu0 %v704
    %981 = vmatpush2.bf16.msra.mxu0 %v703
    %982 = vmatprep.subr.bf16.mxu0 %v702
    %983 = vmatpush2.bf16.msra.mxu0 %v701
    %984 = vmatprep.subr.bf16.mxu0 %v700
    %985 = vmatpush2.bf16.msra.mxu0 %v699
    %986 = vmatprep.subr.bf16.mxu0 %v698
    %987 = vmatpush2.bf16.msra.mxu0 %v697
    %988 = vmatprep.subr.bf16.mxu0 %v696
    %989 = vmatpush2.bf16.msra.mxu0 %v695
    %990 = vmatprep.subr.bf16.mxu0 %v694
    %991 = vmatpush2.bf16.msra.mxu0 %v693
    %992 = vmatprep.mubr.bf16.mxu0 %v56
    %993 = vmatmul.mubr.bf16.gmra.mxu0 %v55
    %v994 = vpop.f32.mrf.mxu0
    %v995 = vadd.f32 %v954, %v994
    %v996 = vpop.f32.mrf.mxu0
    %v997 = vadd.f32 %v956, %v996
    %v998 = vpop.f32.mrf.mxu0
    %v999 = vpop.f32.mrf.mxu0
    %1000 = vdwg.mxu0
    %1001 = vst [vmem:[#allocation7] sm:$0xff] %v995
    %1002 = vst [vmem:[#allocation7 + $0x8] sm:$0xff] %v997
    // Predicated region
    $region22: #{clip_mapper_forward.1} parent=1 // pred_check
      _
    $region23: #{clip_mapper_forward.1} parent=1 // pred_check_branch
      %1004 = sbr.rel (0) target = $region25
    $region24: #{clip_mapper_forward.1} parent=1 // pred_region
      %s1006 = ssub.s32 256, 256
      %1007 = vsyncadd [#allocation4], %s1006
      %s1009 = sshll.u32 [#allocation7], 4
      %s1010 = int_to_ptr.vmem [resolvable:$true] %s1009
      %1012 = dma.vmem_to_hbm [thread:$0]  %s1010, 256, %s3, [#allocation4]
    $region25: #{clip_mapper_forward.1} parent=1 // pred_fallthru
      _
    // Predicated region
    $region26: #{clip_mapper_forward.1} parent=1 // pred_check
      _
    $region27: #{clip_mapper_forward.1} parent=1 // pred_check_branch
      %1014 = sbr.rel (0) target = $region29
    $region28: #{clip_mapper_forward.1} parent=1 // pred_region
      %1015 = dma.done [#allocation4], 256
    $region29: #{clip_mapper_forward.1} parent=1 // pred_fallthru
      _
    %1016 = vsyncpa [#allocation3], 1
    %1017 = vsyncpa [#allocation6], 1
    %1018 = vsyncpa [#allocation4], 1

</llo_original>
